<compile_context>
chip_gen: v5e
topology: v5e:2x2
jax: 0.10.0
libtpu: 0.0.40
codegen_flags: <defaults>
</compile_context>

<pallas_src>
import functools

import jax
import jax.numpy as jnp
from jax.experimental import pallas as pl
from jax.experimental.pallas import tpu as pltpu

MARGIN = 1.0
EPS = 1e-8  # F.cosine_similarity default eps


def _round_up(x, m):
    return (x + m - 1) // m * m


def _vmem_budgets():
    """(vmem_limit_bytes, per-call input-tile budget) sized per generation."""
    phys = None
    try:
        info = pltpu.get_tpu_info()
        phys = getattr(info, "vmem_capacity_bytes", None)
    except Exception:
        phys = None
    if phys is None:
        phys = 64 * 1024 * 1024  # conservative default (v7x-sized)
    if phys >= 96 * 1024 * 1024:
        # v5e / v6e: 128 MiB physical VMEM.
        return 64 * 1024 * 1024, 28 * 1024 * 1024
    # v7x: 64 MiB physical VMEM per TensorCore.
    return 40 * 1024 * 1024, 18 * 1024 * 1024


def _choose_tile_b(batch, dim, itemsize, budget):
    """Largest row tile keeping 2 inputs x 2 pipeline buffers under budget."""
    per_row = 2 * 2 * max(dim, 1) * itemsize
    tile = budget // per_row
    tile = max(8, min(int(tile), 8192))
    tile = (tile // 8) * 8
    # Keep at least 2 grid steps when the batch allows it so both v7x
    # TensorCores get work on the "parallel" batch axis (no effect on v5e/v6e
    # beyond one extra ~0.35us grid step).
    if batch >= 16:
        tile = min(tile, _round_up(pl.cdiv(batch, 2), 8))
    tile = min(tile, _round_up(batch, 8))
    return max(tile, 8)


def _contrastive_loss_kernel(x1_ref, x2_ref, lbl_ref, o_ref, *,
                             batch, tile_b, margin, eps, has_tail):
    i = pl.program_id(0)

    # Keep tiles in their native dtype (bf16-native VALU on v6e/v7x);
    # accumulate the row reductions in f32.
    x1 = x1_ref[...]                           # [tile_b, D]
    x2 = x2_ref[...]                           # [tile_b, D]
    lbl = lbl_ref[...].astype(jnp.float32)     # [tile_b, 1]

    dot = jnp.sum((x1 * x2).astype(jnp.float32), axis=-1, keepdims=True)
    n1sq = jnp.sum((x1 * x1).astype(jnp.float32), axis=-1, keepdims=True)
    n2sq = jnp.sum((x2 * x2).astype(jnp.float32), axis=-1, keepdims=True)

    # cos = dot / (max(|x1|, eps) * max(|x2|, eps))
    #     = dot * rsqrt(max(n1sq, eps^2)) * rsqrt(max(n2sq, eps^2))
    # Two rsqrts (idle EUP slot) avoid overflow of the squared-norm product.
    inv1 = jax.lax.rsqrt(jnp.maximum(n1sq, eps * eps))
    inv2 = jax.lax.rsqrt(jnp.maximum(n2sq, eps * eps))
    d = 1.0 - dot * (inv1 * inv2)              # distances, [tile_b, 1]

    relu_md = jnp.maximum(margin - d, 0.0)
    loss = lbl * d * d + (1.0 - lbl) * relu_md * relu_md  # [tile_b, 1]

    partial = jnp.sum(loss, axis=0, keepdims=True)        # [1, 1]
    # Lane-dense write: broadcast the tile's partial sum across 128 lanes.
    o_ref[...] = jnp.broadcast_to(partial, (1, 128)).astype(jnp.float32)

    if has_tail:
        # Only the last tile has padded rows; mask them there only.
        @pl.when(i == pl.num_programs(0) - 1)
        def _():
            row = jax.lax.broadcasted_iota(jnp.int32, (tile_b, 1), 0) + i * tile_b
            masked = jnp.where(row < batch, loss, 0.0)
            p = jnp.sum(masked, axis=0, keepdims=True)
            o_ref[...] = jnp.broadcast_to(p, (1, 128)).astype(jnp.float32)


def contrastive_loss(output1, output2, label, margin=MARGIN):
    """output1, output2: [B, D] float; label: [B] float (0./1.). Returns scalar."""
    B, D = output1.shape
    label2d = label.reshape(B, 1).astype(jnp.float32)
    itemsize = jnp.dtype(output1.dtype).itemsize

    vmem_limit, tile_budget = _vmem_budgets()
    tile_b = _choose_tile_b(B, D, itemsize, tile_budget)
    num_tiles = pl.cdiv(B, tile_b)
    has_tail = (B % tile_b) != 0

    kernel = functools.partial(
        _contrastive_loss_kernel,
        batch=B, tile_b=tile_b, margin=float(margin), eps=EPS,
        has_tail=has_tail)

    cost = pl.CostEstimate(
        flops=6 * B * D + 12 * B,
        transcendentals=2 * B,
        bytes_accessed=2 * B * D * itemsize + 4 * B + num_tiles * 128 * 4,
    )

    partials = pl.pallas_call(
        kernel,
        out_shape=jax.ShapeDtypeStruct((num_tiles, 128), jnp.float32),
        grid=(num_tiles,),
        in_specs=[
            pl.BlockSpec((tile_b, D), lambda i: (i, 0)),   # output1 tile
            pl.BlockSpec((tile_b, D), lambda i: (i, 0)),   # output2 tile
            pl.BlockSpec((tile_b, 1), lambda i: (i, 0)),   # label tile
        ],
        out_specs=pl.BlockSpec((1, 128), lambda i: (i, 0)),
        compiler_params=pltpu.CompilerParams(
            dimension_semantics=("parallel",),
            vmem_limit_bytes=vmem_limit,
        ),
        cost_estimate=cost,
    )(output1, output2, label2d)

    # Cheap final reduction over per-tile partials; divide by the true B.
    return jnp.sum(partials[:, 0]) / jnp.float32(B)


def _reference(output1, output2, label, margin=MARGIN):
    x1 = output1.astype(jnp.float32)
    x2 = output2.astype(jnp.float32)
    dot = jnp.sum(x1 * x2, axis=1)
    n1 = jnp.sqrt(jnp.sum(x1 * x1, axis=1))
    n2 = jnp.sqrt(jnp.sum(x2 * x2, axis=1))
    cos = dot / (jnp.maximum(n1, EPS) * jnp.maximum(n2, EPS))
    d = 1.0 - cos
    lbl = label.astype(jnp.float32)
    loss = lbl * d ** 2 + (1.0 - lbl) * jnp.maximum(margin - d, 0.0) ** 2
    return jnp.mean(loss)


if __name__ == "__main__":
    key = jax.random.PRNGKey(0)
    k1, k2, k3 = jax.random.split(key, 3)

    B, D = 8, 32  # small synthetic embeddings from a Siamese net
    output1 = jax.random.normal(k1, (B, D), dtype=jnp.float32)
    output2 = jax.random.normal(k2, (B, D), dtype=jnp.float32)
    label = jax.random.bernoulli(k3, 0.5, (B,)).astype(jnp.float32)

    loss = contrastive_loss(output1, output2, label)
    loss = jax.block_until_ready(loss)

    ref = _reference(output1, output2, label)
    assert jnp.allclose(loss, ref, atol=1e-5, rtol=1e-5), (loss, ref)

    print("KERNEL_OK")
</pallas_src>

<mosaic_0001>
module attributes {stable_mosaic.version = 11 : i64} {
  func.func @_contrastive_loss_kernel(%arg0: i32, %arg1: memref<8x32xf32, #tpu.memory_space<vmem>>, %arg2: memref<8x32xf32, #tpu.memory_space<vmem>>, %arg3: memref<8x1xf32, #tpu.memory_space<vmem>>, %arg4: memref<1x128xf32, #tpu.memory_space<vmem>>) attributes {dimension_semantics = [#tpu.dimension_semantics<parallel>], iteration_bounds = array<i64: 1>, scalar_prefetch = 0 : i64, scratch_operands = 0 : i64, tpu.core_type = #tpu.core_type<tc>, window_params = [{transform_indices = @transform_0, window_bounds = array<i64: 8, 32>}, {transform_indices = @transform_1, window_bounds = array<i64: 8, 32>}, {transform_indices = @transform_2, window_bounds = array<i64: 8, 1>}, {transform_indices = @transform_3, window_bounds = array<i64: 1, 128>}]} {
    %c0 = arith.constant 0 : index
    %c0_0 = arith.constant 0 : index
    %0 = vector.load %arg1[%c0, %c0_0] : memref<8x32xf32, #tpu.memory_space<vmem>>, vector<8x32xf32>
    %c0_1 = arith.constant 0 : index
    %c0_2 = arith.constant 0 : index
    %1 = vector.load %arg2[%c0_1, %c0_2] : memref<8x32xf32, #tpu.memory_space<vmem>>, vector<8x32xf32>
    %c0_3 = arith.constant 0 : index
    %c0_4 = arith.constant 0 : index
    %2 = vector.load %arg3[%c0_3, %c0_4] : memref<8x1xf32, #tpu.memory_space<vmem>>, vector<8x1xf32>
    %3 = arith.mulf %0, %1 : vector<8x32xf32>
    %cst = arith.constant dense<0.000000e+00> : vector<8xf32>
    %4 = vector.multi_reduction <add>, %3, %cst [1] : vector<8x32xf32> to vector<8xf32>
    %5 = vector.shape_cast %4 : vector<8xf32> to vector<8x1xf32>
    %6 = arith.mulf %0, %0 : vector<8x32xf32>
    %cst_5 = arith.constant dense<0.000000e+00> : vector<8xf32>
    %7 = vector.multi_reduction <add>, %6, %cst_5 [1] : vector<8x32xf32> to vector<8xf32>
    %8 = vector.shape_cast %7 : vector<8xf32> to vector<8x1xf32>
    %9 = arith.mulf %1, %1 : vector<8x32xf32>
    %cst_6 = arith.constant dense<0.000000e+00> : vector<8xf32>
    %10 = vector.multi_reduction <add>, %9, %cst_6 [1] : vector<8x32xf32> to vector<8xf32>
    %11 = vector.shape_cast %10 : vector<8xf32> to vector<8x1xf32>
    %cst_7 = arith.constant 1.000000e-16 : f32
    %12 = vector.broadcast %cst_7 : f32 to vector<8x1xf32>
    %13 = arith.maximumf %8, %12 : vector<8x1xf32>
    %14 = math.rsqrt %13 : vector<8x1xf32>
    %cst_8 = arith.constant 1.000000e-16 : f32
    %15 = vector.broadcast %cst_8 : f32 to vector<8x1xf32>
    %16 = arith.maximumf %11, %15 : vector<8x1xf32>
    %17 = math.rsqrt %16 : vector<8x1xf32>
    %18 = arith.mulf %14, %17 : vector<8x1xf32>
    %19 = arith.mulf %5, %18 : vector<8x1xf32>
    %cst_9 = arith.constant 1.000000e+00 : f32
    %20 = vector.broadcast %cst_9 : f32 to vector<8x1xf32>
    %21 = arith.subf %20, %19 : vector<8x1xf32>
    %cst_10 = arith.constant 1.000000e+00 : f32
    %22 = vector.broadcast %cst_10 : f32 to vector<8x1xf32>
    %23 = arith.subf %22, %21 : vector<8x1xf32>
    %cst_11 = arith.constant 0.000000e+00 : f32
    %24 = vector.broadcast %cst_11 : f32 to vector<8x1xf32>
    %25 = arith.maximumf %23, %24 : vector<8x1xf32>
    %26 = arith.mulf %2, %21 : vector<8x1xf32>
    %27 = arith.mulf %26, %21 : vector<8x1xf32>
    %cst_12 = arith.constant 1.000000e+00 : f32
    %28 = vector.broadcast %cst_12 : f32 to vector<8x1xf32>
    %29 = arith.subf %28, %2 : vector<8x1xf32>
    %30 = arith.mulf %29, %25 : vector<8x1xf32>
    %31 = arith.mulf %30, %25 : vector<8x1xf32>
    %32 = arith.addf %27, %31 : vector<8x1xf32>
    %cst_13 = arith.constant dense<0.000000e+00> : vector<1xf32>
    %33 = vector.multi_reduction <add>, %32, %cst_13 [0] : vector<8x1xf32> to vector<1xf32>
    %34 = vector.shape_cast %33 : vector<1xf32> to vector<1x1xf32>
    %35 = vector.shape_cast %34 : vector<1x1xf32> to vector<1x1xf32>
    %36 = vector.broadcast %35 : vector<1x1xf32> to vector<1x128xf32>
    %c0_14 = arith.constant 0 : index
    %c0_15 = arith.constant 0 : index
    %37 = vector.load %arg4[%c0_14, %c0_15] : memref<1x128xf32, #tpu.memory_space<vmem>>, vector<1x128xf32>
    tpu.vector_store %arg4[%c0_14, %c0_15], %36 {strides = array<i32>} : memref<1x128xf32, #tpu.memory_space<vmem>>, vector<1x128xf32>,
    return
  }
  func.func @transform_0(%arg0: i32) -> (i32, i32) {
    %c0_i32 = arith.constant 0 : i32
    %c0_i32_0 = arith.constant 0 : i32
    return %arg0, %c0_i32 : i32, i32
  }
  func.func @transform_1(%arg0: i32) -> (i32, i32) {
    %c0_i32 = arith.constant 0 : i32
    %c0_i32_0 = arith.constant 0 : i32
    return %arg0, %c0_i32 : i32, i32
  }
  func.func @transform_2(%arg0: i32) -> (i32, i32) {
    %c0_i32 = arith.constant 0 : i32
    %c0_i32_0 = arith.constant 0 : i32
    return %arg0, %c0_i32 : i32, i32
  }
  func.func @transform_3(%arg0: i32) -> (i32, i32) {
    %c0_i32 = arith.constant 0 : i32
    %c0_i32_0 = arith.constant 0 : i32
    return %arg0, %c0_i32 : i32, i32
  }
}

</mosaic_0001>

<llo_original>
// kernel: tpu_custom_call.1
$region0: #{tpu_custom_call.1}
  #allocation0 [shape = 'u32[]', space=smem, size = 0x4, offset = 0x4, fixed_abs, tag = 'smem constant byte address 0x4 - core index']
  #allocation1 [shape = 'u32[72,128]{1,0:T(1,128)}', space=vmem, size = 0x9000, scoped, tag = 'internal scratch']
  %s0 = inlined_call_operand.vmem [shape: f32[8,32], index: 0, kind: input, shape index: {}]
  %s1 = inlined_call_operand.hbm [shape: f32[8,32], index: 1, kind: input, shape index: {}]
  %s2 = inlined_call_operand.vmem [shape: f32[8,1], index: 2, kind: input, shape index: {}]
  %s3 = inlined_call_operand.hbm [shape: f32[1,128], index: 3, kind: output, shape index: {}]
  %s4 = sld [smem:[#allocation0]]
  $region26: #{tpu_custom_call.1} parent=0
    _
  %s6 = ssub.s32 1, %s4
  %s7 = scalar_select 0, %s6, %s4
  $region1: #{tpu_custom_call.1} parent=0
    #allocation2 [shape = 'u8[4096]{0}', space=vmem, size = 0x1000, scoped, tag = 'input window, operand 1, single buffered']
    #allocation3 [shape = 's32[1]{0}', space=sflag, size = 0x4, scoped, tag = 'scoped memory for tpu_custom_call.1']
    #allocation4 [shape = 's32[1]{0}', space=sflag, size = 0x4, scoped, tag = 'scoped memory for tpu_custom_call.1']
    #allocation5 [shape = 'u8[512]{0}', space=vmem, size = 0x400, scoped, tag = 'output window, operand 0, single buffered']
    %8 = vsyncpa [#allocation3], 0
    %9 = vsyncpa [#allocation4], 0
    // Predicated region
    $region2: #{tpu_custom_call.1} parent=1 // pred_check
      _
    $region3: #{tpu_custom_call.1} parent=1 // pred_check_branch
      %11 = sbr.rel (0) target = $region5
    $region4: #{tpu_custom_call.1} parent=1 // pred_region
      _
    $region5: #{tpu_custom_call.1} parent=1 // pred_fallthru
      _
    // Predicated region
    $region6: #{tpu_custom_call.1} parent=1 // pred_check
      _
    $region7: #{tpu_custom_call.1} parent=1 // pred_check_branch
      %13 = sbr.rel (0) target = $region9
    $region8: #{tpu_custom_call.1} parent=1 // pred_region
      %15 = vsyncadd [#allocation3], 0
      %s17 = sshll.u32 %s1, 4
      %s18 = int_to_ptr.hbm [resolvable:$true] %s17
      %s19 = sshll.u32 [#allocation2], 4
      %s20 = int_to_ptr.vmem [resolvable:$true] %s19
      %22 = dma.hbm_to_vmem [thread:$0]  %s18, 128, %s20, [#allocation3]
    $region9: #{tpu_custom_call.1} parent=1 // pred_fallthru
      _
    // Predicated region
    $region10: #{tpu_custom_call.1} parent=1 // pred_check
      _
    $region11: #{tpu_custom_call.1} parent=1 // pred_check_branch
      %24 = sbr.rel (0) target = $region13
    $region12: #{tpu_custom_call.1} parent=1 // pred_region
      _
    $region13: #{tpu_custom_call.1} parent=1 // pred_fallthru
      _
    // Predicated region
    $region14: #{tpu_custom_call.1} parent=1 // pred_check
      _
    $region15: #{tpu_custom_call.1} parent=1 // pred_check_branch
      %26 = sbr.rel (0) target = $region17
    $region16: #{tpu_custom_call.1} parent=1 // pred_region
      %28 = dma.done [#allocation3], 128
    $region17: #{tpu_custom_call.1} parent=1 // pred_fallthru
      _
    %v29 = vld [vmem:[%s0] sm:$0xff]
    %v30 = vld [vmem:[#allocation2] sm:$0xff]
    %v31 = vld [vmem:[%s2] sm:$0xff]
    %v32 = vmul.f32 %v29, %v30
    %vm33 = vcmask 261120
    %v34 = vsel %vm33, %v32, 0.0
    %35 = vadd.xlane.f32.xlu0 %v34
    %v36 = vpop.xlane.xlu0 %35
    %v37 = vmul.f32 %v29, %v29
    %v38 = vsel %vm33, %v37, 0.0
    %39 = vadd.xlane.f32.xlu0 %v38
    %v40 = vpop.xlane.xlu0 %39
    %v41 = vmul.f32 %v30, %v30
    %v42 = vsel %vm33, %v41, 0.0
    %43 = vadd.xlane.f32.xlu0 %v42
    %v44 = vpop.xlane.xlu0 %43
    %v45 = vmax.f32 %v40, 1e-16
    %v46 = vrsqrt.pop %v45
    %v47 = vmul.f32 %v46, %v45
    %v48 = vmul.f32 %v47, %v46
    %v49 = vmul.f32 0.5, %v48
    %v50 = vsub.f32 1.5, %v49
    %v51 = vmul.f32 %v46, %v50
    %vm52 = vweird.f32 %v45
    %vm53 = vweird.f32 %v46
    %vm54 = vmor %vm52, %vm53
    %v55 = vsel %vm54, %v46, %v51
    %v56 = vmax.f32 %v44, 1e-16
    %v57 = vrsqrt.pop %v56
    %v58 = vmul.f32 %v57, %v56
    %v59 = vmul.f32 %v58, %v57
    %v60 = vmul.f32 0.5, %v59
    %v61 = vsub.f32 1.5, %v60
    %v62 = vmul.f32 %v57, %v61
    %vm63 = vweird.f32 %v56
    %vm64 = vweird.f32 %v57
    %vm65 = vmor %vm63, %vm64
    %v66 = vsel %vm65, %v57, %v62
    %v67 = vmul.f32 %v55, %v66
    %v68 = vmul.f32 %v36, %v67
    %v69 = vsub.f32 1.0, %v68
    %v70 = vsub.f32 1.0, %v69
    %v71 = vmax.f32 %v70, 0.0
    %v72 = vmul.f32 %v31, %v69
    %v73 = vmul.f32 %v72, %v69
    %v74 = vsub.f32 1.0, %v31
    %v75 = vmul.f32 %v74, %v71
    %v76 = vmul.f32 %v75, %v71
    %v77 = vadd.f32 %v73, %v76
    %vm78 = vcmask 7168
    %v79 = vsel %vm78, %v77, 0.0
    %v80 = vrot.slane %v79, 4
    %v81 = vadd.f32 %v79, %v80
    %v82 = vrot.slane %v81, 2
    %v83 = vadd.f32 %v81, %v82
    %v84 = vrot.slane %v83, 1
    %v85 = vadd.f32 %v83, %v84
    %87 = vset.pattern.permute.xlu0 0
    %88 = vperm.xlu0 %87, %v85
    %v89 = vpop.permute.xlu0 %88
    %91 = vst [vmem:[#allocation5] sm:$0x1] %v89
    // Predicated region
    $region18: #{tpu_custom_call.1} parent=1 // pred_check
      _
    $region19: #{tpu_custom_call.1} parent=1 // pred_check_branch
      %93 = sbr.rel (0) target = $region21
    $region20: #{tpu_custom_call.1} parent=1 // pred_region
      %95 = vsyncadd [#allocation4], 0
      %s97 = sshll.u32 [#allocation5], 4
      %s98 = int_to_ptr.vmem [resolvable:$true] %s97
      %s99 = sshll.u32 %s3, 4
      %s100 = int_to_ptr.hbm [resolvable:$true] %s99
      %102 = dma.vmem_to_hbm [thread:$0]  %s98, 16, %s100, [#allocation4]
    $region21: #{tpu_custom_call.1} parent=1 // pred_fallthru
      _
    // Predicated region
    $region22: #{tpu_custom_call.1} parent=1 // pred_check
      _
    $region23: #{tpu_custom_call.1} parent=1 // pred_check_branch
      %104 = sbr.rel (0) target = $region25
    $region24: #{tpu_custom_call.1} parent=1 // pred_region
      %106 = dma.done [#allocation4], 16
    $region25: #{tpu_custom_call.1} parent=1 // pred_fallthru
      _
    %107 = vsyncpa [#allocation3], 1
    %108 = vsyncpa [#allocation4], 1

</llo_original>
